<compile_context>
chip_gen: v7x
topology: tpu7x:2x2x1
jax: 0.10.0
libtpu: 0.0.40
codegen_flags: <defaults>
</compile_context>

<pallas_src>
import functools

import jax
import jax.numpy as jnp
from jax.experimental import pallas as pl
from jax.experimental.pallas import tpu as pltpu

_LANES = 128
_ROW_ALIGN = 32        # multiple-of-32 sublane rows keeps tiling legal for any dtype
_MAX_TILE_ROWS = 1024  # (1024,128) f32 block = 512 KiB; 3 arrays x 2 bufs ≈ 3 MiB VMEM


def _round_up(x: int, m: int) -> int:
    return ((x + m - 1) // m) * m


def _focal_kernel(x_ref, t_ref, o_ref, *, gamma: float, alpha: float):
    x = x_ref[...].astype(jnp.float32)
    is_pos = t_ref[...] == 1

    p = jax.nn.sigmoid(x)
    q = 1.0 - p
    # Keep the +1e-16 epsilon of the PyTorch module for exact semantic parity.
    log_p = jnp.log(p + 1e-16)
    log_q = jnp.log(q + 1e-16)

    # Integer-gamma fast path: explicit multiplies instead of pow (= exp(g*log(x))),
    # halving the EUP transcendental count per element.
    if float(gamma) == int(gamma) and 0 <= int(gamma) <= 8:
        pow_q = jnp.ones_like(q)
        pow_p = jnp.ones_like(p)
        for _ in range(int(gamma)):
            pow_q = pow_q * q
            pow_p = pow_p * p
    else:
        pow_q = jnp.power(q, gamma)
        pow_p = jnp.power(p, gamma)

    pos = (-alpha) * pow_q * log_p   # positive branch: -a*(1-p)^g*log(p+eps)
    neg = (-alpha) * pow_p * log_q   # negative branch: -a*p^g*log(1-p+eps)
    o_ref[...] = jnp.where(is_pos, pos, neg).astype(o_ref.dtype)


def binary_focal_loss(inputs: jax.Array, targets: jax.Array,
                      gamma: float = 2.0, alpha: float = 1.0) -> jax.Array:
    """Returns 1-D loss = concat([pos_loss, neg_loss]) in flatten order,
    matching PyTorch BinaryFocalLoss.forward semantics."""
    assert inputs.shape == targets.shape
    n = inputs.size

    # Flatten in native dtypes (no f32 upcast copy in HBM; the kernel casts in VMEM).
    x_flat = inputs.reshape(-1)
    t_flat = targets.reshape(-1)

    rows = pl.cdiv(n, _LANES)
    tile_rows = min(_MAX_TILE_ROWS, _round_up(rows, _ROW_ALIGN))
    padded_rows = _round_up(rows, tile_rows)
    padded_n = padded_rows * _LANES
    if padded_n != n:
        # TODO(synk): for very large inputs this jnp.pad still copies the whole
        # array once; a masked ragged-tail path would avoid it.
        x_flat = jnp.pad(x_flat, (0, padded_n - n))
        t_flat = jnp.pad(t_flat, (0, padded_n - n))
    x2d = x_flat.reshape(padded_rows, _LANES)
    t2d = t_flat.reshape(padded_rows, _LANES)

    grid = (padded_rows // tile_rows,)
    kernel = functools.partial(_focal_kernel, gamma=float(gamma), alpha=float(alpha))

    bytes_accessed = padded_n * (x2d.dtype.itemsize + t2d.dtype.itemsize + 4)
    loss2d = pl.pallas_call(
        kernel,
        out_shape=jax.ShapeDtypeStruct((padded_rows, _LANES), jnp.float32),
        grid=grid,
        in_specs=[
            pl.BlockSpec((tile_rows, _LANES), lambda i: (i, 0)),
            pl.BlockSpec((tile_rows, _LANES), lambda i: (i, 0)),
        ],
        out_specs=pl.BlockSpec((tile_rows, _LANES), lambda i: (i, 0)),
        compiler_params=pltpu.CompilerParams(
            dimension_semantics=("parallel",)),
        cost_estimate=pl.CostEstimate(
            flops=12 * padded_n,
            transcendentals=3 * padded_n,
            bytes_accessed=bytes_accessed),
    )(x2d, t2d)

    loss_flat = loss2d.reshape(-1)[:n]

    # Glue: reproduce torch.cat([loss[mask], loss[~mask]]) flatten order with an
    # O(n) stable partition (cumsum ranks), not an argsort.
    mask = targets.reshape(-1) == 1
    mask_i = mask.astype(jnp.int32)
    num_pos = jnp.sum(mask_i)
    pos_rank = jnp.cumsum(mask_i) - 1                  # destination for positives
    neg_rank = jnp.cumsum(1 - mask_i) - 1 + num_pos    # destination for negatives
    dest = jnp.where(mask, pos_rank, neg_rank)
    return jnp.zeros((n,), jnp.float32).at[dest].set(loss_flat, unique_indices=True)


def _reference(inputs, targets, gamma=2.0, alpha=1.0):
    # Exact transcription of the PyTorch forward.
    p = jax.nn.sigmoid(inputs.astype(jnp.float32)).reshape(-1)
    t = targets.reshape(-1)
    pos_mask = t == 1
    pos_loss = -alpha * jnp.power(1.0 - p, gamma) * jnp.log(p + 1e-16)
    neg_loss = -alpha * jnp.power(p, gamma) * jnp.log(1.0 - p + 1e-16)
    return jnp.concatenate([pos_loss[pos_mask], neg_loss[~pos_mask]])


if __name__ == "__main__":
    key = jax.random.PRNGKey(0)
    k1, k2 = jax.random.split(key)
    # Typical face-detection head logits: (batch, anchors, H, W).
    x = jax.random.normal(k1, (2, 4, 16, 16), dtype=jnp.float32) * 2.0
    target = (jax.random.uniform(k2, (2, 4, 16, 16)) < 0.3).astype(jnp.float32)

    loss = binary_focal_loss(x, target, gamma=2.0, alpha=1.0)
    loss = jax.block_until_ready(loss)

    ref = _reference(x, target, gamma=2.0, alpha=1.0)
    assert loss.shape == ref.shape, (loss.shape, ref.shape)
    assert jnp.allclose(loss, ref, atol=1e-5, rtol=1e-5), "mismatch vs reference"

    print("KERNEL_OK")
</pallas_src>

<mosaic_0001>
module attributes {stable_mosaic.version = 11 : i64} {
  func.func @_focal_kernel(%arg0: i32, %arg1: memref<32x128xf32, #tpu.memory_space<vmem>>, %arg2: memref<32x128xf32, #tpu.memory_space<vmem>>, %arg3: memref<32x128xf32, #tpu.memory_space<vmem>>) attributes {dimension_semantics = [#tpu.dimension_semantics<parallel>], iteration_bounds = array<i64: 1>, scalar_prefetch = 0 : i64, scratch_operands = 0 : i64, tpu.core_type = #tpu.core_type<tc>, window_params = [{transform_indices = @transform_0, window_bounds = array<i64: 32, 128>}, {transform_indices = @transform_1, window_bounds = array<i64: 32, 128>}, {transform_indices = @transform_2, window_bounds = array<i64: 32, 128>}]} {
    %c0 = arith.constant 0 : index
    %c0_0 = arith.constant 0 : index
    %0 = vector.load %arg1[%c0, %c0_0] : memref<32x128xf32, #tpu.memory_space<vmem>>, vector<32x128xf32>
    %c0_1 = arith.constant 0 : index
    %c0_2 = arith.constant 0 : index
    %1 = vector.load %arg2[%c0_1, %c0_2] : memref<32x128xf32, #tpu.memory_space<vmem>>, vector<32x128xf32>
    %cst = arith.constant 1.000000e+00 : f32
    %2 = vector.broadcast %cst : f32 to vector<32x128xf32>
    %3 = arith.cmpf oeq, %1, %2 : vector<32x128xf32>
    %4 = arith.negf %0 : vector<32x128xf32>
    %5 = math.exp %4 : vector<32x128xf32>
    %cst_3 = arith.constant 1.000000e+00 : f32
    %6 = vector.broadcast %cst_3 : f32 to vector<32x128xf32>
    %7 = arith.addf %6, %5 : vector<32x128xf32>
    %8 = arith.divf %6, %7 : vector<32x128xf32>
    %cst_4 = arith.constant 1.000000e+00 : f32
    %9 = vector.broadcast %cst_4 : f32 to vector<32x128xf32>
    %10 = arith.subf %9, %8 : vector<32x128xf32>
    %cst_5 = arith.constant 1.000000e-16 : f32
    %11 = vector.broadcast %cst_5 : f32 to vector<32x128xf32>
    %12 = arith.addf %8, %11 : vector<32x128xf32>
    %13 = math.log %12 : vector<32x128xf32>
    %cst_6 = arith.constant 1.000000e-16 : f32
    %14 = vector.broadcast %cst_6 : f32 to vector<32x128xf32>
    %15 = arith.addf %10, %14 : vector<32x128xf32>
    %16 = math.log %15 : vector<32x128xf32>
    %cst_7 = arith.constant 1.000000e+00 : f32
    %17 = vector.broadcast %cst_7 : f32 to vector<32x128xf32>
    %cst_8 = arith.constant 1.000000e+00 : f32
    %18 = vector.broadcast %cst_8 : f32 to vector<32x128xf32>
    %19 = arith.mulf %17, %10 : vector<32x128xf32>
    %20 = arith.mulf %18, %8 : vector<32x128xf32>
    %21 = arith.mulf %19, %10 : vector<32x128xf32>
    %22 = arith.mulf %20, %8 : vector<32x128xf32>
    %cst_9 = arith.constant -1.000000e+00 : f32
    %23 = vector.broadcast %cst_9 : f32 to vector<32x128xf32>
    %24 = arith.mulf %23, %21 : vector<32x128xf32>
    %25 = arith.mulf %24, %13 : vector<32x128xf32>
    %cst_10 = arith.constant -1.000000e+00 : f32
    %26 = vector.broadcast %cst_10 : f32 to vector<32x128xf32>
    %27 = arith.mulf %26, %22 : vector<32x128xf32>
    %28 = arith.mulf %27, %16 : vector<32x128xf32>
    %29 = arith.select %3, %25, %28 : vector<32x128xi1>, vector<32x128xf32>
    %c0_11 = arith.constant 0 : index
    %c0_12 = arith.constant 0 : index
    %30 = vector.load %arg3[%c0_11, %c0_12] : memref<32x128xf32, #tpu.memory_space<vmem>>, vector<32x128xf32>
    tpu.vector_store %arg3[%c0_11, %c0_12], %29 {strides = array<i32>} : memref<32x128xf32, #tpu.memory_space<vmem>>, vector<32x128xf32>,
    return
  }
  func.func @transform_0(%arg0: i32) -> (i32, i32) {
    %c0_i32 = arith.constant 0 : i32
    %c0_i32_0 = arith.constant 0 : i32
    return %arg0, %c0_i32 : i32, i32
  }
  func.func @transform_1(%arg0: i32) -> (i32, i32) {
    %c0_i32 = arith.constant 0 : i32
    %c0_i32_0 = arith.constant 0 : i32
    return %arg0, %c0_i32 : i32, i32
  }
  func.func @transform_2(%arg0: i32) -> (i32, i32) {
    %c0_i32 = arith.constant 0 : i32
    %c0_i32_0 = arith.constant 0 : i32
    return %arg0, %c0_i32 : i32, i32
  }
}

</mosaic_0001>

<llo_original>
// kernel: tpu_custom_call.1
$region0: #{tpu_custom_call.1}
  #allocation0 [shape = 'u32[]', space=smem, size = 0x4, offset = 0x4, fixed_abs, tag = 'smem constant byte address 0x4 - core index']
  #allocation1 [shape = 'u32[144,128]{1,0:T(1,128)}', space=vmem, size = 0x12000, scoped, tag = 'internal scratch']
  %s0 = inlined_call_operand.hbm [shape: f32[32,128], index: 0, kind: input, shape index: {}]
  %s1 = inlined_call_operand.hbm [shape: f32[32,128], index: 1, kind: input, shape index: {}]
  %s2 = inlined_call_operand.hbm [shape: f32[32,128], index: 2, kind: output, shape index: {}]
  %s3 = sld [smem:[#allocation0]]
  $region26: #{tpu_custom_call.1} parent=0
    _
  %s5 = ssub.s32 1, %s3
  %s6 = scalar_select 0, %s5, %s3
  $region1: #{tpu_custom_call.1} parent=0
    #allocation2 [shape = 'u8[16384]{0}', space=vmem, size = 0x4000, scoped, tag = 'input window, operand 0, single buffered']
    #allocation3 [shape = 's32[1]{0}', space=sflag, size = 0x4, scoped, tag = 'scoped memory for tpu_custom_call.1']
    #allocation4 [shape = 's32[1]{0}', space=sflag, size = 0x4, scoped, tag = 'scoped memory for tpu_custom_call.1']
    #allocation5 [shape = 'u8[16384]{0}', space=vmem, size = 0x4000, scoped, tag = 'input window, operand 1, single buffered']
    #allocation6 [shape = 's32[1]{0}', space=sflag, size = 0x4, scoped, tag = 'scoped memory for tpu_custom_call.1']
    #allocation7 [shape = 'u8[16384]{0}', space=vmem, size = 0x4000, scoped, tag = 'output window, operand 0, single buffered']
    %7 = vsyncpa [#allocation3], 0
    %8 = vsyncpa [#allocation6], 0
    %9 = vsyncpa [#allocation4], 0
    // Predicated region
    $region2: #{tpu_custom_call.1} parent=1 // pred_check
      _
    $region3: #{tpu_custom_call.1} parent=1 // pred_check_branch
      %11 = sbr.rel (0) target = $region5
    $region4: #{tpu_custom_call.1} parent=1 // pred_region
      %s13 = ssub.s32 512, 512
      %14 = vsyncadd [#allocation3], %s13
      %s15 = sshll.u32 [#allocation2], 4
      %s16 = int_to_ptr.vmem [resolvable:$true] %s15
      %21 = dma.hbm_to_vmem [thread:$0]  %s0, 512, %s16, [#allocation3], 128, 128, 8
    $region5: #{tpu_custom_call.1} parent=1 // pred_fallthru
      _
    // Predicated region
    $region6: #{tpu_custom_call.1} parent=1 // pred_check
      _
    $region7: #{tpu_custom_call.1} parent=1 // pred_check_branch
      %23 = sbr.rel (0) target = $region9
    $region8: #{tpu_custom_call.1} parent=1 // pred_region
      %s25 = ssub.s32 512, 512
      %26 = vsyncadd [#allocation6], %s25
      %s27 = sshll.u32 [#allocation5], 4
      %s28 = int_to_ptr.vmem [resolvable:$true] %s27
      %33 = dma.hbm_to_vmem [thread:$0]  %s1, 512, %s28, [#allocation6], 128, 128, 8
    $region9: #{tpu_custom_call.1} parent=1 // pred_fallthru
      _
    // Predicated region
    $region10: #{tpu_custom_call.1} parent=1 // pred_check
      _
    $region11: #{tpu_custom_call.1} parent=1 // pred_check_branch
      %35 = sbr.rel (0) target = $region13
    $region12: #{tpu_custom_call.1} parent=1 // pred_region
      %36 = dma.done [#allocation3], 512
    $region13: #{tpu_custom_call.1} parent=1 // pred_fallthru
      _
    // Predicated region
    $region14: #{tpu_custom_call.1} parent=1 // pred_check
      _
    $region15: #{tpu_custom_call.1} parent=1 // pred_check_branch
      %38 = sbr.rel (0) target = $region17
    $region16: #{tpu_custom_call.1} parent=1 // pred_region
      %39 = dma.done [#allocation6], 512
    $region17: #{tpu_custom_call.1} parent=1 // pred_fallthru
      _
    %v40 = vld [vmem:[#allocation2] sm:$0xff]
    %v41 = vld [vmem:[#allocation2 + $0x8] sm:$0xff]
    %v42 = vld [vmem:[#allocation2 + $0x10] sm:$0xff]
    %v43 = vld [vmem:[#allocation2 + $0x18] sm:$0xff]
    %v44 = vld [vmem:[#allocation5] sm:$0xff]
    %v45 = vld [vmem:[#allocation5 + $0x8] sm:$0xff]
    %v46 = vld [vmem:[#allocation5 + $0x10] sm:$0xff]
    %v47 = vld [vmem:[#allocation5 + $0x18] sm:$0xff]
    %vm48 = vcmp.eq.f32.partialorder %v44, 1.0
    %vm49 = vcmp.eq.f32.partialorder %v45, 1.0
    %vm50 = vcmp.eq.f32.partialorder %v46, 1.0
    %vm51 = vcmp.eq.f32.partialorder %v47, 1.0
    %v52 = vxor.u32 %v40, 2147483648
    %v53 = vxor.u32 %v41, 2147483648
    %v54 = vxor.u32 %v42, 2147483648
    %v55 = vxor.u32 %v43, 2147483648
    %v56 = vmul.f32 %v52, 1.442695
    %v57 = vpow.pop %v56
    %v58 = vmul.f32 %v53, 1.442695
    %v59 = vpow.pop %v58
    %v60 = vmul.f32 %v54, 1.442695
    %v61 = vpow.pop %v60
    %v62 = vmul.f32 %v55, 1.442695
    %v63 = vpow.pop %v62
    %v64 = vadd.f32 %v57, 1.0
    %v65 = vadd.f32 %v59, 1.0
    %v66 = vadd.f32 %v61, 1.0
    %v67 = vadd.f32 %v63, 1.0
    %v68 = vrcp.pop %v64
    %v69 = vmul.f32 1.0, %v68
    %v70 = vrcp.pop %v65
    %v71 = vmul.f32 1.0, %v70
    %v72 = vrcp.pop %v66
    %v73 = vmul.f32 1.0, %v72
    %v74 = vrcp.pop %v67
    %v75 = vmul.f32 1.0, %v74
    %v76 = vsub.f32 1.0, %v69
    %v77 = vsub.f32 1.0, %v71
    %v78 = vsub.f32 1.0, %v73
    %v79 = vsub.f32 1.0, %v75
    %v80 = vadd.f32 %v69, 1e-16
    %v81 = vadd.f32 %v71, 1e-16
    %v82 = vadd.f32 %v73, 1e-16
    %v83 = vadd.f32 %v75, 1e-16
    %v84 = vlog2.pop %v80
    %v85 = vmul.f32 %v84, 0.6931472
    %v86 = vlog2.pop %v81
    %v87 = vmul.f32 %v86, 0.6931472
    %v88 = vlog2.pop %v82
    %v89 = vmul.f32 %v88, 0.6931472
    %v90 = vlog2.pop %v83
    %v91 = vmul.f32 %v90, 0.6931472
    %v92 = vadd.f32 %v76, 1e-16
    %v93 = vadd.f32 %v77, 1e-16
    %v94 = vadd.f32 %v78, 1e-16
    %v95 = vadd.f32 %v79, 1e-16
    %v96 = vlog2.pop %v92
    %v97 = vmul.f32 %v96, 0.6931472
    %v98 = vlog2.pop %v93
    %v99 = vmul.f32 %v98, 0.6931472
    %v100 = vlog2.pop %v94
    %v101 = vmul.f32 %v100, 0.6931472
    %v102 = vlog2.pop %v95
    %v103 = vmul.f32 %v102, 0.6931472
    %v104 = vmul.f32 %v76, %v76
    %v105 = vmul.f32 %v77, %v77
    %v106 = vmul.f32 %v78, %v78
    %v107 = vmul.f32 %v79, %v79
    %v108 = vmul.f32 %v69, %v69
    %v109 = vmul.f32 %v71, %v71
    %v110 = vmul.f32 %v73, %v73
    %v111 = vmul.f32 %v75, %v75
    %v112 = vmul.f32 %v104, -1.0
    %v113 = vmul.f32 %v105, -1.0
    %v114 = vmul.f32 %v106, -1.0
    %v115 = vmul.f32 %v107, -1.0
    %v116 = vmul.f32 %v112, %v85
    %v117 = vmul.f32 %v113, %v87
    %v118 = vmul.f32 %v114, %v89
    %v119 = vmul.f32 %v115, %v91
    %v120 = vmul.f32 %v108, -1.0
    %v121 = vmul.f32 %v109, -1.0
    %v122 = vmul.f32 %v110, -1.0
    %v123 = vmul.f32 %v111, -1.0
    %v124 = vmul.f32 %v120, %v97
    %v125 = vmul.f32 %v121, %v99
    %v126 = vmul.f32 %v122, %v101
    %v127 = vmul.f32 %v123, %v103
    %v128 = vsel %vm48, %v116, %v124
    %v129 = vsel %vm49, %v117, %v125
    %v130 = vsel %vm50, %v118, %v126
    %v131 = vsel %vm51, %v119, %v127
    %132 = vst [vmem:[#allocation7] sm:$0xff] %v128
    %133 = vst [vmem:[#allocation7 + $0x8] sm:$0xff] %v129
    %134 = vst [vmem:[#allocation7 + $0x10] sm:$0xff] %v130
    %135 = vst [vmem:[#allocation7 + $0x18] sm:$0xff] %v131
    // Predicated region
    $region18: #{tpu_custom_call.1} parent=1 // pred_check
      _
    $region19: #{tpu_custom_call.1} parent=1 // pred_check_branch
      %137 = sbr.rel (0) target = $region21
    $region20: #{tpu_custom_call.1} parent=1 // pred_region
      %s139 = ssub.s32 512, 512
      %140 = vsyncadd [#allocation4], %s139
      %s141 = sshll.u32 [#allocation7], 4
      %s142 = int_to_ptr.vmem [resolvable:$true] %s141
      %147 = dma.vmem_to_hbm [thread:$0]  %s142, 512, %s2, [#allocation4], 128, 128, 8
    $region21: #{tpu_custom_call.1} parent=1 // pred_fallthru
      _
    // Predicated region
    $region22: #{tpu_custom_call.1} parent=1 // pred_check
      _
    $region23: #{tpu_custom_call.1} parent=1 // pred_check_branch
      %149 = sbr.rel (0) target = $region25
    $region24: #{tpu_custom_call.1} parent=1 // pred_region
      %150 = dma.done [#allocation4], 512
    $region25: #{tpu_custom_call.1} parent=1 // pred_fallthru
      _
    %151 = vsyncpa [#allocation3], 1
    %152 = vsyncpa [#allocation6], 1
    %153 = vsyncpa [#allocation4], 1

</llo_original>
